<compile_context>
chip_gen: v6e
topology: v6e:2x2x1
jax: 0.10.0
libtpu: 0.0.40
codegen_flags: <defaults>
</compile_context>

<pallas_src>
import jax
import jax.numpy as jnp
from jax.experimental import pallas as pl
from jax.experimental.pallas import tpu as pltpu


# ----------------------------------------------------------------------------
# Bilinear (align_corners=True) resize expressed as a dense matrix.
# ----------------------------------------------------------------------------
def bilinear_matrix(out_size: int, in_size: int) -> jnp.ndarray:
    """Returns W of shape (out_size, in_size) s.t. out = W @ in (1-D resize)."""
    if in_size == 1:
        return jnp.ones((out_size, 1), jnp.float32)
    if out_size == 1:
        src = jnp.zeros((1,), jnp.float32)
    else:
        i = jnp.arange(out_size, dtype=jnp.float32)
        src = i * (in_size - 1) / (out_size - 1)      # align_corners=True
    lo = jnp.clip(jnp.floor(src).astype(jnp.int32), 0, in_size - 2)
    frac = src - lo.astype(jnp.float32)
    w = jnp.zeros((out_size, in_size), jnp.float32)
    rows = jnp.arange(out_size)
    w = w.at[rows, lo].add(1.0 - frac)
    w = w.at[rows, lo + 1].add(frac)
    return w


# ----------------------------------------------------------------------------
# Pallas kernel: Nb batch elements of the full SideOutput forward per step.
# All compute tensors are (rows, H*W)-shaped -> lane-dense loads/stores.
# ----------------------------------------------------------------------------
def make_side_output_kernel(nb: int):
    IB0, IB1, IFW1, IFB = 0, 1, 2, 3      # SMEM scalar params layout

    def kernel(p_ref, w0_ref, w1_ref, bt_ref, x0_ref, x1_ref, o_ref):
        b0 = p_ref[IB0]
        b1 = p_ref[IB1]
        fw1 = p_ref[IFW1]
        fb = p_ref[IFB]
        w0 = w0_ref[...]          # (1, C0)
        w1 = w1_ref[...]          # (1, C1)
        bt = bt_ref[...]          # (H1*W1, H*W), already scaled by fuse w0

        # nb is small (VMEM-budgeted); static unroll keeps MXU busy per batch.
        for b in range(nb):
            # branch 0: 1x1 conv (C0 -> 1) + ReLU, on the MXU, lane-dense.
            s0 = jnp.maximum(
                jnp.dot(w0, x0_ref[b], preferred_element_type=jnp.float32)
                + b0, 0.0)                                        # (1, H*W)
            # branch 1: 1x1 conv (C1 -> 1) + ReLU at coarse resolution.
            s1 = jnp.maximum(
                jnp.dot(w1, x1_ref[b], preferred_element_type=jnp.float32)
                + b1, 0.0)                                        # (1, H1*W1)
            # bilinear upsample (+ fuse weight fw0), folded into one matmul.
            up = jnp.dot(s1, bt, preferred_element_type=jnp.float32)  # (1, H*W)
            # fuse + sigmoid (sigmoid rides the EUP slot).
            o_ref[b] = jax.nn.sigmoid(up + fw1 * s0 + fb)

    return kernel


def side_output_forward(x0, x1, w0, b0, w1, b1, fw, fb,
                        *, vmem_block_budget_bytes=16 * 1024 * 1024):
    """x0: (N, C0, H, W), x1: (N, C1, H1, W1) -> (N, 1, H, W)."""
    N, C0, H, W = x0.shape
    _, C1, H1, W1 = x1.shape
    HW, H1W1 = H * W, H1 * W1

    # ---- host-side layout / constant folding --------------------------------
    x0f = x0.astype(jnp.float32).reshape(N, C0, HW)       # lane-dense view
    x1f = x1.astype(jnp.float32).reshape(N, C1, H1W1)
    w0m = jnp.asarray(w0, jnp.float32).reshape(1, C0)
    w1m = jnp.asarray(w1, jnp.float32).reshape(1, C1)

    wh = bilinear_matrix(H, H1)                            # (H, H1)
    ww = bilinear_matrix(W, W1)                            # (W, W1)
    # up_flat = kron(Wh, Ww) @ s1_flat ; fold fuse weight fw[0] (linear, post-ReLU).
    bt = (jnp.asarray(fw[0], jnp.float32) * jnp.kron(wh, ww)).T  # (H1W1, HW)

    params = jnp.stack([
        jnp.asarray(b0, jnp.float32),
        jnp.asarray(b1, jnp.float32),
        jnp.asarray(fw[1], jnp.float32),
        jnp.asarray(fb, jnp.float32),
    ])

    # ---- choose batch-block size from an explicit VMEM budget ---------------
    per_batch_bytes = 4 * (C0 * HW + C1 * H1W1 + HW)       # x0 + x1 + out, f32
    nb = int(max(1, min(N, vmem_block_budget_bytes // (2 * per_batch_bytes))))
    grid = (pl.cdiv(N, nb),)
    const_bytes = 4 * (bt.size + w0m.size + w1m.size)
    vmem_limit = int(min(max(4 * nb * per_batch_bytes + 2 * const_bytes
                             + (4 << 20), 32 << 20), 64 << 20))

    kernel = make_side_output_kernel(nb)

    out_flat = pl.pallas_call(
        kernel,
        out_shape=jax.ShapeDtypeStruct((N, 1, HW), jnp.float32),
        grid=grid,
        in_specs=[
            pl.BlockSpec(memory_space=pltpu.MemorySpace.SMEM),          # scalar params
            pl.BlockSpec((1, C0), lambda n: (0, 0)),                    # w0  (VMEM)
            pl.BlockSpec((1, C1), lambda n: (0, 0)),                    # w1  (VMEM)
            pl.BlockSpec((H1W1, HW), lambda n: (0, 0)),                 # Bt  (VMEM)
            pl.BlockSpec((nb, C0, HW), lambda n: (n, 0, 0)),            # x0 flat
            pl.BlockSpec((nb, C1, H1W1), lambda n: (n, 0, 0)),          # x1 flat
        ],
        out_specs=pl.BlockSpec((nb, 1, HW), lambda n: (n, 0, 0)),
        compiler_params=pltpu.CompilerParams(
            dimension_semantics=("parallel",),
            vmem_limit_bytes=vmem_limit),
    )(params, w0m, w1m, bt, x0f, x1f)

    return out_flat.reshape(N, 1, H, W)


# ----------------------------------------------------------------------------
# Pure-JAX reference (same math, no Pallas) for a sanity check.
# ----------------------------------------------------------------------------
def side_output_reference(x0, x1, w0, b0, w1, b1, fw, fb):
    _, _, H, W = x0.shape
    _, _, H1, W1 = x1.shape
    wh = bilinear_matrix(H, H1)
    ww = bilinear_matrix(W, W1)
    s0 = jnp.maximum(jnp.einsum('nchw,c->nhw', x0, w0) + b0, 0.0)
    s1 = jnp.maximum(jnp.einsum('nchw,c->nhw', x1, w1) + b1, 0.0)
    up = jnp.einsum('hk,nkl,wl->nhw', wh, s1, ww)
    fused = fw[0] * up + fw[1] * s0 + fb
    return jax.nn.sigmoid(fused)[:, None, :, :]


if __name__ == "__main__":
    # Small shapes consistent with the module: two side inputs.
    N = 2
    C0, H, W = 4, 16, 16          # branch 0 (finest, target resolution)
    C1, H1, W1 = 8, 8, 8          # branch 1 (coarser, gets upsampled)

    key = jax.random.PRNGKey(0)
    k_x0, k_x1, k_w0, k_w1, k_fw = jax.random.split(key, 5)

    x0 = jax.random.normal(k_x0, (N, C0, H, W), jnp.float32)
    x1 = jax.random.normal(k_x1, (N, C1, H1, W1), jnp.float32)

    # Deterministic synthetic parameters (shapes from the 1x1 convs).
    w0 = jax.random.normal(k_w0, (C0,), jnp.float32) * 0.3   # Conv2d(C0,1,1) weight
    b0 = jnp.float32(0.1)                                    # Conv2d(C0,1,1) bias
    w1 = jax.random.normal(k_w1, (C1,), jnp.float32) * 0.3   # Conv2d(C1,1,1) weight
    b1 = jnp.float32(-0.05)                                  # Conv2d(C1,1,1) bias
    fw = jax.random.normal(k_fw, (2,), jnp.float32) * 0.5    # fuse Conv2d(2,1,1) weight
    fb = jnp.float32(0.2)                                    # fuse bias

    out = side_output_forward(x0, x1, w0, b0, w1, b1, fw, fb)
    out = jax.block_until_ready(out)

    ref = side_output_reference(x0, x1, w0, b0, w1, b1, fw, fb)
    ref = jax.block_until_ready(ref)

    assert out.shape == (N, 1, H, W), out.shape
    if not jnp.allclose(out, ref, atol=1e-3, rtol=1e-3):
        raise AssertionError("Pallas kernel mismatch vs JAX reference")

    print("KERNEL_OK")
</pallas_src>

<mosaic_0001>
module attributes {stable_mosaic.version = 11 : i64} {
  func.func @kernel(%arg0: i32, %arg1: memref<4xf32, #tpu.memory_space<smem>>, %arg2: memref<1x4xf32, #tpu.memory_space<vmem>>, %arg3: memref<1x8xf32, #tpu.memory_space<vmem>>, %arg4: memref<64x256xf32, #tpu.memory_space<vmem>>, %arg5: memref<2x4x256xf32, #tpu.memory_space<vmem>>, %arg6: memref<2x8x64xf32, #tpu.memory_space<vmem>>, %arg7: memref<2x1x256xf32, #tpu.memory_space<vmem>>) attributes {dimension_semantics = [#tpu.dimension_semantics<parallel>], iteration_bounds = array<i64: 1>, scalar_prefetch = 0 : i64, scratch_operands = 0 : i64, tpu.core_type = #tpu.core_type<tc>, window_params = [{transform_indices = @transform_0, window_bounds = array<i64: 4>}, {pipeline_mode = #tpu.pipeline_mode<synchronous>, transform_indices = @transform_1, window_bounds = array<i64: 1, 4>}, {pipeline_mode = #tpu.pipeline_mode<synchronous>, transform_indices = @transform_2, window_bounds = array<i64: 1, 8>}, {pipeline_mode = #tpu.pipeline_mode<synchronous>, transform_indices = @transform_3, window_bounds = array<i64: 64, 256>}, {transform_indices = @transform_4, window_bounds = array<i64: 2, 4, 256>}, {transform_indices = @transform_5, window_bounds = array<i64: 2, 8, 64>}, {transform_indices = @transform_6, window_bounds = array<i64: 2, 1, 256>}]} {
    %c0 = arith.constant 0 : index
    %0 = memref.load %arg1[%c0] : memref<4xf32, #tpu.memory_space<smem>>
    %c1 = arith.constant 1 : index
    %1 = memref.load %arg1[%c1] : memref<4xf32, #tpu.memory_space<smem>>
    %c2 = arith.constant 2 : index
    %2 = memref.load %arg1[%c2] : memref<4xf32, #tpu.memory_space<smem>>
    %c3 = arith.constant 3 : index
    %3 = memref.load %arg1[%c3] : memref<4xf32, #tpu.memory_space<smem>>
    %c0_0 = arith.constant 0 : index
    %c0_1 = arith.constant 0 : index
    %4 = vector.load %arg2[%c0_0, %c0_1] : memref<1x4xf32, #tpu.memory_space<vmem>>, vector<1x4xf32>
    %c0_2 = arith.constant 0 : index
    %c0_3 = arith.constant 0 : index
    %5 = vector.load %arg3[%c0_2, %c0_3] : memref<1x8xf32, #tpu.memory_space<vmem>>, vector<1x8xf32>
    %c0_4 = arith.constant 0 : index
    %c0_5 = arith.constant 0 : index
    %6 = vector.load %arg4[%c0_4, %c0_5] : memref<64x256xf32, #tpu.memory_space<vmem>>, vector<64x256xf32>
    %c0_6 = arith.constant 0 : index
    %c0_7 = arith.constant 0 : index
    %c0_8 = arith.constant 0 : index
    %7 = vector.load %arg5[%c0_6, %c0_7, %c0_8] : memref<2x4x256xf32, #tpu.memory_space<vmem>>, vector<1x4x256xf32>
    %8 = vector.shape_cast %7 : vector<1x4x256xf32> to vector<4x256xf32>
    %cst = arith.constant dense<0.000000e+00> : vector<1x256xf32>
    %9 = tpu.matmul %4, %8, %cst {dimension_numbers = #tpu.dot_dimension_numbers<[1], [0], [0], [1], [0, 0, 1, 1], [], []>} : vector<1x4xf32>, vector<4x256xf32>, vector<1x256xf32> -> vector<1x256xf32>
    %10 = vector.broadcast %0 : f32 to vector<1x256xf32>
    %11 = arith.addf %9, %10 : vector<1x256xf32>
    %cst_9 = arith.constant 0.000000e+00 : f32
    %12 = vector.broadcast %cst_9 : f32 to vector<1x256xf32>
    %13 = arith.maximumf %11, %12 : vector<1x256xf32>
    %c0_10 = arith.constant 0 : index
    %c0_11 = arith.constant 0 : index
    %c0_12 = arith.constant 0 : index
    %14 = vector.load %arg6[%c0_10, %c0_11, %c0_12] : memref<2x8x64xf32, #tpu.memory_space<vmem>>, vector<1x8x64xf32>
    %15 = vector.shape_cast %14 : vector<1x8x64xf32> to vector<8x64xf32>
    %cst_13 = arith.constant dense<0.000000e+00> : vector<1x64xf32>
    %16 = tpu.matmul %5, %15, %cst_13 {dimension_numbers = #tpu.dot_dimension_numbers<[1], [0], [0], [1], [0, 0, 1, 1], [], []>} : vector<1x8xf32>, vector<8x64xf32>, vector<1x64xf32> -> vector<1x64xf32>
    %17 = vector.broadcast %1 : f32 to vector<1x64xf32>
    %18 = arith.addf %16, %17 : vector<1x64xf32>
    %cst_14 = arith.constant 0.000000e+00 : f32
    %19 = vector.broadcast %cst_14 : f32 to vector<1x64xf32>
    %20 = arith.maximumf %18, %19 : vector<1x64xf32>
    %cst_15 = arith.constant dense<0.000000e+00> : vector<1x256xf32>
    %21 = tpu.matmul %20, %6, %cst_15 {dimension_numbers = #tpu.dot_dimension_numbers<[1], [0], [0], [1], [0, 0, 1, 1], [], []>} : vector<1x64xf32>, vector<64x256xf32>, vector<1x256xf32> -> vector<1x256xf32>
    %22 = vector.broadcast %2 : f32 to vector<1x256xf32>
    %23 = arith.mulf %22, %13 : vector<1x256xf32>
    %24 = arith.addf %21, %23 : vector<1x256xf32>
    %25 = vector.broadcast %3 : f32 to vector<1x256xf32>
    %26 = arith.addf %24, %25 : vector<1x256xf32>
    %27 = arith.negf %26 : vector<1x256xf32>
    %28 = math.exp %27 : vector<1x256xf32>
    %cst_16 = arith.constant 1.000000e+00 : f32
    %29 = vector.broadcast %cst_16 : f32 to vector<1x256xf32>
    %30 = arith.addf %29, %28 : vector<1x256xf32>
    %31 = arith.divf %29, %30 : vector<1x256xf32>
    %c0_17 = arith.constant 0 : index
    %c0_18 = arith.constant 0 : index
    %c0_19 = arith.constant 0 : index
    %32 = vector.load %arg7[%c0_17, %c0_18, %c0_19] : memref<2x1x256xf32, #tpu.memory_space<vmem>>, vector<1x1x256xf32>
    %33 = vector.shape_cast %32 : vector<1x1x256xf32> to vector<1x256xf32>
    %34 = vector.shape_cast %31 : vector<1x256xf32> to vector<1x1x256xf32>
    tpu.vector_store %arg7[%c0_17, %c0_18, %c0_19], %34 {strides = array<i32>} : memref<2x1x256xf32, #tpu.memory_space<vmem>>, vector<1x1x256xf32>,
    %c1_20 = arith.constant 1 : index
    %c0_21 = arith.constant 0 : index
    %c0_22 = arith.constant 0 : index
    %35 = vector.load %arg5[%c1_20, %c0_21, %c0_22] : memref<2x4x256xf32, #tpu.memory_space<vmem>>, vector<1x4x256xf32>
    %36 = vector.shape_cast %35 : vector<1x4x256xf32> to vector<4x256xf32>
    %cst_23 = arith.constant dense<0.000000e+00> : vector<1x256xf32>
    %37 = tpu.matmul %4, %36, %cst_23 {dimension_numbers = #tpu.dot_dimension_numbers<[1], [0], [0], [1], [0, 0, 1, 1], [], []>} : vector<1x4xf32>, vector<4x256xf32>, vector<1x256xf32> -> vector<1x256xf32>
    %38 = vector.broadcast %0 : f32 to vector<1x256xf32>
    %39 = arith.addf %37, %38 : vector<1x256xf32>
    %cst_24 = arith.constant 0.000000e+00 : f32
    %40 = vector.broadcast %cst_24 : f32 to vector<1x256xf32>
    %41 = arith.maximumf %39, %40 : vector<1x256xf32>
    %c1_25 = arith.constant 1 : index
    %c0_26 = arith.constant 0 : index
    %c0_27 = arith.constant 0 : index
    %42 = vector.load %arg6[%c1_25, %c0_26, %c0_27] : memref<2x8x64xf32, #tpu.memory_space<vmem>>, vector<1x8x64xf32>
    %43 = vector.shape_cast %42 : vector<1x8x64xf32> to vector<8x64xf32>
    %cst_28 = arith.constant dense<0.000000e+00> : vector<1x64xf32>
    %44 = tpu.matmul %5, %43, %cst_28 {dimension_numbers = #tpu.dot_dimension_numbers<[1], [0], [0], [1], [0, 0, 1, 1], [], []>} : vector<1x8xf32>, vector<8x64xf32>, vector<1x64xf32> -> vector<1x64xf32>
    %45 = vector.broadcast %1 : f32 to vector<1x64xf32>
    %46 = arith.addf %44, %45 : vector<1x64xf32>
    %cst_29 = arith.constant 0.000000e+00 : f32
    %47 = vector.broadcast %cst_29 : f32 to vector<1x64xf32>
    %48 = arith.maximumf %46, %47 : vector<1x64xf32>
    %cst_30 = arith.constant dense<0.000000e+00> : vector<1x256xf32>
    %49 = tpu.matmul %48, %6, %cst_30 {dimension_numbers = #tpu.dot_dimension_numbers<[1], [0], [0], [1], [0, 0, 1, 1], [], []>} : vector<1x64xf32>, vector<64x256xf32>, vector<1x256xf32> -> vector<1x256xf32>
    %50 = vector.broadcast %2 : f32 to vector<1x256xf32>
    %51 = arith.mulf %50, %41 : vector<1x256xf32>
    %52 = arith.addf %49, %51 : vector<1x256xf32>
    %53 = vector.broadcast %3 : f32 to vector<1x256xf32>
    %54 = arith.addf %52, %53 : vector<1x256xf32>
    %55 = arith.negf %54 : vector<1x256xf32>
    %56 = math.exp %55 : vector<1x256xf32>
    %cst_31 = arith.constant 1.000000e+00 : f32
    %57 = vector.broadcast %cst_31 : f32 to vector<1x256xf32>
    %58 = arith.addf %57, %56 : vector<1x256xf32>
    %59 = arith.divf %57, %58 : vector<1x256xf32>
    %c1_32 = arith.constant 1 : index
    %c0_33 = arith.constant 0 : index
    %c0_34 = arith.constant 0 : index
    %60 = vector.load %arg7[%c1_32, %c0_33, %c0_34] : memref<2x1x256xf32, #tpu.memory_space<vmem>>, vector<1x1x256xf32>
    %61 = vector.shape_cast %60 : vector<1x1x256xf32> to vector<1x256xf32>
    %62 = vector.shape_cast %59 : vector<1x256xf32> to vector<1x1x256xf32>
    tpu.vector_store %arg7[%c1_32, %c0_33, %c0_34], %62 {strides = array<i32>} : memref<2x1x256xf32, #tpu.memory_space<vmem>>, vector<1x1x256xf32>,
    return
  }
  func.func @transform_0(%arg0: i32) -> i32 {
    %c0_i32 = arith.constant 0 : i32
    %c0_i32_0 = arith.constant 0 : i32
    return %c0_i32 : i32
  }
  func.func @transform_1(%arg0: i32) -> (i32, i32) {
    %c0_i32 = arith.constant 0 : i32
    %c0_i32_0 = arith.constant 0 : i32
    %c0_i32_1 = arith.constant 0 : i32
    return %c0_i32, %c0_i32_0 : i32, i32
  }
  func.func @transform_2(%arg0: i32) -> (i32, i32) {
    %c0_i32 = arith.constant 0 : i32
    %c0_i32_0 = arith.constant 0 : i32
    %c0_i32_1 = arith.constant 0 : i32
    return %c0_i32, %c0_i32_0 : i32, i32
  }
  func.func @transform_3(%arg0: i32) -> (i32, i32) {
    %c0_i32 = arith.constant 0 : i32
    %c0_i32_0 = arith.constant 0 : i32
    %c0_i32_1 = arith.constant 0 : i32
    return %c0_i32, %c0_i32_0 : i32, i32
  }
  func.func @transform_4(%arg0: i32) -> (i32, i32, i32) {
    %c0_i32 = arith.constant 0 : i32
    %c0_i32_0 = arith.constant 0 : i32
    %c0_i32_1 = arith.constant 0 : i32
    return %arg0, %c0_i32, %c0_i32_0 : i32, i32, i32
  }
  func.func @transform_5(%arg0: i32) -> (i32, i32, i32) {
    %c0_i32 = arith.constant 0 : i32
    %c0_i32_0 = arith.constant 0 : i32
    %c0_i32_1 = arith.constant 0 : i32
    return %arg0, %c0_i32, %c0_i32_0 : i32, i32, i32
  }
  func.func @transform_6(%arg0: i32) -> (i32, i32, i32) {
    %c0_i32 = arith.constant 0 : i32
    %c0_i32_0 = arith.constant 0 : i32
    %c0_i32_1 = arith.constant 0 : i32
    return %arg0, %c0_i32, %c0_i32_0 : i32, i32, i32
  }
}

</mosaic_0001>

<llo_original>
// kernel: tpu_custom_call.1
$region0: #{tpu_custom_call.1}
  #allocation0 [shape = 'u32[]', space=smem, size = 0x4, offset = 0x4, fixed_abs, tag = 'smem constant byte address 0x4 - core index']
  #allocation1 [shape = 'u32[144,128]{1,0:T(1,128)}', space=vmem, size = 0x12000, scoped, tag = 'internal scratch']
  %s0 = inlined_call_operand.hbm [shape: f32[4], index: 0, kind: input, shape index: {}]
  %s1 = inlined_call_operand.vmem [shape: f32[1,4], index: 1, kind: input, shape index: {}]
  %s2 = inlined_call_operand.vmem [shape: f32[1,8], index: 2, kind: input, shape index: {}]
  %s3 = inlined_call_operand.hbm [shape: f32[64,256], index: 3, kind: input, shape index: {}]
  %s4 = inlined_call_operand.hbm [shape: f32[2,4,256], index: 4, kind: input, shape index: {}]
  %s5 = inlined_call_operand.hbm [shape: f32[2,8,64], index: 5, kind: input, shape index: {}]
  %s6 = inlined_call_operand.hbm [shape: f32[2,1,256], index: 6, kind: output, shape index: {}]
  %s7 = sld [smem:[#allocation0]]
  $region50: #{tpu_custom_call.1} parent=0
    _
  %s9 = ssub.s32 1, %s7
  %s10 = scalar_select 0, %s9, %s7
  $region1: #{tpu_custom_call.1} parent=0
    #allocation2 [shape = 'u8[512]{0}', space=smem, size = 0x200, scoped, tag = 'input window, operand 0, single buffered']
    #allocation3 [shape = 's32[1]{0}', space=sflag, size = 0x4, scoped, tag = 'scoped memory for tpu_custom_call.1']
    #allocation4 [shape = 's32[1]{0}', space=sflag, size = 0x4, scoped, tag = 'scoped memory for tpu_custom_call.1']
    #allocation5 [shape = 's32[1]{0}', space=sflag, size = 0x4, scoped, tag = 'scoped memory for tpu_custom_call.1']
    #allocation6 [shape = 'u8[65536]{0}', space=vmem, size = 0x10000, scoped, tag = 'input window, operand 3, single buffered']
    #allocation7 [shape = 'u8[8192]{0}', space=vmem, size = 0x2000, scoped, tag = 'input window, operand 4, single buffered']
    #allocation8 [shape = 's32[1]{0}', space=sflag, size = 0x4, scoped, tag = 'scoped memory for tpu_custom_call.1']
    #allocation9 [shape = 'u8[8192]{0}', space=vmem, size = 0x2000, scoped, tag = 'input window, operand 5, single buffered']
    #allocation10 [shape = 'u8[2048]{0}', space=vmem, size = 0x800, scoped, tag = 'output window, operand 0, single buffered']
    %11 = vsyncpa [#allocation5], 0
    %12 = vsyncpa [#allocation3], 0
    %13 = vsyncpa [#allocation8], 0
    %14 = vsyncpa [#allocation4], 0
    // Predicated region
    $region2: #{tpu_custom_call.1} parent=1 // pred_check
      _
    $region3: #{tpu_custom_call.1} parent=1 // pred_check_branch
      %16 = sbr.rel (0) target = $region5
    $region4: #{tpu_custom_call.1} parent=1 // pred_region
      %s18 = ssub.s32 16, 16
      %19 = vsyncadd [#allocation5], %s18
      %22 = dma.hbm_to_smem %s0, 16, [#allocation2], [#allocation5]
    $region5: #{tpu_custom_call.1} parent=1 // pred_fallthru
      _
    // Predicated region
    $region6: #{tpu_custom_call.1} parent=1 // pred_check
      _
    $region7: #{tpu_custom_call.1} parent=1 // pred_check_branch
      %24 = sbr.rel (0) target = $region9
    $region8: #{tpu_custom_call.1} parent=1 // pred_region
      _
    $region9: #{tpu_custom_call.1} parent=1 // pred_fallthru
      _
    // Predicated region
    $region10: #{tpu_custom_call.1} parent=1 // pred_check
      _
    $region11: #{tpu_custom_call.1} parent=1 // pred_check_branch
      %26 = sbr.rel (0) target = $region13
    $region12: #{tpu_custom_call.1} parent=1 // pred_region
      _
    $region13: #{tpu_custom_call.1} parent=1 // pred_fallthru
      _
    // Predicated region
    $region14: #{tpu_custom_call.1} parent=1 // pred_check
      _
    $region15: #{tpu_custom_call.1} parent=1 // pred_check_branch
      %28 = sbr.rel (0) target = $region17
    $region16: #{tpu_custom_call.1} parent=1 // pred_region
      %s30 = ssub.s32 2048, 2048
      %31 = vsyncadd [#allocation3], %s30
      %s32 = sshll.u32 [#allocation6], 4
      %s33 = int_to_ptr.vmem [resolvable:$true] %s32
      %38 = dma.hbm_to_vmem [thread:$0]  %s3, 2048, %s33, [#allocation3], 256, 256, 16
    $region17: #{tpu_custom_call.1} parent=1 // pred_fallthru
      _
    // Predicated region
    $region18: #{tpu_custom_call.1} parent=1 // pred_check
      _
    $region19: #{tpu_custom_call.1} parent=1 // pred_check_branch
      %40 = sbr.rel (0) target = $region21
    $region20: #{tpu_custom_call.1} parent=1 // pred_region
      %s42 = ssub.s32 256, 256
      %43 = vsyncadd [#allocation8], %s42
      %s44 = sshll.u32 [#allocation7], 4
      %s45 = int_to_ptr.vmem [resolvable:$true] %s44
      %50 = dma.hbm_to_vmem [thread:$0]  %s4, 256, %s45, [#allocation8], 128, 128, 8
    $region21: #{tpu_custom_call.1} parent=1 // pred_fallthru
      _
    // Predicated region
    $region22: #{tpu_custom_call.1} parent=1 // pred_check
      _
    $region23: #{tpu_custom_call.1} parent=1 // pred_check_branch
      %52 = sbr.rel (0) target = $region25
    $region24: #{tpu_custom_call.1} parent=1 // pred_region
      %s54 = ssub.s32 256, 256
      %55 = vsyncadd [#allocation8], %s54
      %s56 = sshll.u32 [#allocation9], 4
      %s57 = int_to_ptr.vmem [resolvable:$true] %s56
      %62 = dma.hbm_to_vmem [thread:$0]  %s5, 256, %s57, [#allocation8], 128, 128, 8
    $region25: #{tpu_custom_call.1} parent=1 // pred_fallthru
      _
    // Predicated region
    $region26: #{tpu_custom_call.1} parent=1 // pred_check
      _
    $region27: #{tpu_custom_call.1} parent=1 // pred_check_branch
      %64 = sbr.rel (0) target = $region29
    $region28: #{tpu_custom_call.1} parent=1 // pred_region
      %65 = dma.done [#allocation5], 16
    $region29: #{tpu_custom_call.1} parent=1 // pred_fallthru
      _
    // Predicated region
    $region30: #{tpu_custom_call.1} parent=1 // pred_check
      _
    $region31: #{tpu_custom_call.1} parent=1 // pred_check_branch
      %67 = sbr.rel (0) target = $region33
    $region32: #{tpu_custom_call.1} parent=1 // pred_region
      %68 = dma.done [#allocation3], 2048
    $region33: #{tpu_custom_call.1} parent=1 // pred_fallthru
      _
    // Predicated region
    $region34: #{tpu_custom_call.1} parent=1 // pred_check
      _
    $region35: #{tpu_custom_call.1} parent=1 // pred_check_branch
      %70 = sbr.rel (0) target = $region37
    $region36: #{tpu_custom_call.1} parent=1 // pred_region
      %71 = dma.done [#allocation8], 256
    $region37: #{tpu_custom_call.1} parent=1 // pred_fallthru
      _
    // Predicated region
    $region38: #{tpu_custom_call.1} parent=1 // pred_check
      _
    $region39: #{tpu_custom_call.1} parent=1 // pred_check_branch
      %73 = sbr.rel (0) target = $region41
    $region40: #{tpu_custom_call.1} parent=1 // pred_region
      %74 = dma.done [#allocation8], 256
    $region41: #{tpu_custom_call.1} parent=1 // pred_fallthru
      _
    %75 = sfence
    %s76 = sld [smem:[#allocation2]]
    %s77 = sld [smem:[#allocation2 + $0x1]]
    %s78 = sld [smem:[#allocation2 + $0x2]]
    %s79 = sld [smem:[#allocation2 + $0x3]]
    %v80 = vld [vmem:[%s1] sm:$0x1]
    %v81 = vld [vmem:[%s2] sm:$0x1]
    %v82 = vld [vmem:[#allocation6] sm:$0xff]
    %v83 = vld [vmem:[#allocation6 + $0x8] sm:$0xff]
    %v84 = vld [vmem:[#allocation6 + $0x10] sm:$0xff]
    %v85 = vld [vmem:[#allocation6 + $0x18] sm:$0xff]
    %v86 = vld [vmem:[#allocation6 + $0x20] sm:$0xff]
    %v87 = vld [vmem:[#allocation6 + $0x28] sm:$0xff]
    %v88 = vld [vmem:[#allocation6 + $0x30] sm:$0xff]
    %v89 = vld [vmem:[#allocation6 + $0x38] sm:$0xff]
    %v90 = vld [vmem:[#allocation6 + $0x40] sm:$0xff]
    %v91 = vld [vmem:[#allocation6 + $0x48] sm:$0xff]
    %v92 = vld [vmem:[#allocation6 + $0x50] sm:$0xff]
    %v93 = vld [vmem:[#allocation6 + $0x58] sm:$0xff]
    %v94 = vld [vmem:[#allocation6 + $0x60] sm:$0xff]
    %v95 = vld [vmem:[#allocation6 + $0x68] sm:$0xff]
    %v96 = vld [vmem:[#allocation6 + $0x70] sm:$0xff]
    %v97 = vld [vmem:[#allocation6 + $0x78] sm:$0xff]
    %v98 = vld [vmem:[#allocation7] sm:$0xff]
    %v99 = vstv %s76
    %v101 = vcombine.high %v98, %v98
    %vm102 = vcmask 31744
    %v104 = vsel %vm102, %v80, 0
    %vm106 = vcmask 1043456
    %v107 = vsel %vm106, %v98, 0
    %v109 = vsel %vm106, %v101, 0
    %111 = vmatprep.subr.mxu0 0.0
    %112 = vmatpush1.msra.mxu0 0.0
    %113 = vmatprep.subr.mxu0 0.0
    %114 = vmatpush1.msra.mxu0 0.0
    %115 = vmatprep.subr.mxu0 0.0
    %116 = vmatpush1.msra.mxu0 0.0
    %117 = vmatprep.subr.mxu0 0.0
    %118 = vmatpush1.msra.mxu0 0.0
    %119 = vmatprep.subr.mxu0 0.0
    %120 = vmatpush1.msra.mxu0 0.0
    %121 = vmatprep.subr.mxu0 0.0
    %122 = vmatpush1.msra.mxu0 0.0
    %123 = vmatprep.subr.mxu0 0.0
    %124 = vmatpush1.msra.mxu0 0.0
    %125 = vmatprep.subr.mxu0 0.0
    %126 = vmatpush1.msra.mxu0 0.0
    %127 = vmatprep.subr.mxu0 0.0
    %128 = vmatpush1.msra.mxu0 0.0
    %129 = vmatprep.subr.mxu0 0.0
    %130 = vmatpush1.msra.mxu0 0.0
    %131 = vmatprep.subr.mxu0 0.0
    %132 = vmatpush1.msra.mxu0 0.0
    %133 = vmatprep.subr.mxu0 0.0
    %134 = vmatpush1.msra.mxu0 0.0
    %135 = vmatprep.subr.mxu0 0.0
    %136 = vmatpush1.msra.mxu0 0.0
    %137 = vmatprep.subr.mxu0 0.0
    %138 = vmatpush1.msra.mxu0 0.0
    %139 = vmatprep.subr.mxu0 0.0
    %140 = vmatpush1.msra.mxu0 0.0
    %141 = vmatprep.subr.mxu0 %v109
    %142 = vmatpush1.msra.mxu0 %v107
    %143 = vmatprep.subr.mxu0 0.0
    %144 = vmatpush2.msra.mxu0 0.0
    %145 = vmatprep.subr.mxu0 0.0
    %146 = vmatpush2.msra.mxu0 0.0
    %147 = vmatprep.subr.mxu0 0.0
    %148 = vmatpush2.msra.mxu0 0.0
    %149 = vmatprep.subr.mxu0 0.0
    %150 = vmatpush2.msra.mxu0 0.0
    %151 = vmatprep.subr.mxu0 0.0
    %152 = vmatpush2.msra.mxu0 0.0
    %153 = vmatprep.subr.mxu0 0.0
    %154 = vmatpush2.msra.mxu0 0.0
    %155 = vmatprep.subr.mxu0 0.0
    %156 = vmatpush2.msra.mxu0 0.0
    %157 = vmatprep.subr.mxu0 0.0
    %158 = vmatpush2.msra.mxu0 0.0
    %159 = vmatprep.subr.mxu0 0.0
    %160 = vmatpush2.msra.mxu0 0.0
    %161 = vmatprep.subr.mxu0 0.0
    %162 = vmatpush2.msra.mxu0 0.0
    %163 = vmatprep.subr.mxu0 0.0
    %164 = vmatpush2.msra.mxu0 0.0
    %165 = vmatprep.subr.mxu0 0.0
    %166 = vmatpush2.msra.mxu0 0.0
    %167 = vmatprep.subr.mxu0 0.0
    %168 = vmatpush2.msra.mxu0 0.0
    %169 = vmatprep.subr.mxu0 0.0
    %170 = vmatpush2.msra.mxu0 0.0
    %171 = vmatprep.subr.mxu0 0.0
    %172 = vmatpush2.msra.mxu0 0.0
    %173 = vmatprep.subr.mxu0 0.0
    %174 = vmatpush2.msra.mxu0 0.0
    %175 = vmatprep.mubr.f32.mxu0 0.0
    %176 = vmatmul.mubr.f32.gmra.mxu0 %v104
    %v177 = vpop.f32.mrf.mxu0
    %v178 = vadd.f32 %v99, %v177
    %v179 = vpop.f32.mrf.mxu0
    %v180 = vadd.f32 %v99, %v179
    %181 = vdwg.mxu0
    %v182 = vmax.f32 %v178, 0.0
    %v183 = vmax.f32 %v180, 0.0
    %v184 = vld [vmem:[#allocation9] sm:$0xff]
    %v185 = vstv %s77
    %vm186 = vcmask 64512
    %v188 = vsel %vm186, %v81, 0
    %190 = vmatprep.subr.mxu0 0.0
    %191 = vmatpush1.msra.mxu0 0.0
    %192 = vmatprep.subr.mxu0 0.0
    %193 = vmatpush1.msra.mxu0 0.0
    %194 = vmatprep.subr.mxu0 0.0
    %195 = vmatpush1.msra.mxu0 0.0
    %196 = vmatprep.subr.mxu0 0.0
    %197 = vmatpush1.msra.mxu0 0.0
    %198 = vmatprep.subr.mxu0 0.0
    %199 = vmatpush1.msra.mxu0 0.0
    %200 = vmatprep.subr.mxu0 0.0
    %201 = vmatpush1.msra.mxu0 0.0
    %202 = vmatprep.subr.mxu0 0.0
    %203 = vmatpush1.msra.mxu0 0.0
    %204 = vmatprep.subr.mxu0 0.0
    %205 = vmatpush1.msra.mxu0 0.0
    %206 = vmatprep.subr.mxu0 0.0
    %207 = vmatpush1.msra.mxu0 0.0
    %208 = vmatprep.subr.mxu0 0.0
    %209 = vmatpush1.msra.mxu0 0.0
    %210 = vmatprep.subr.mxu0 0.0
    %211 = vmatpush1.msra.mxu0 0.0
    %212 = vmatprep.subr.mxu0 0.0
    %213 = vmatpush1.msra.mxu0 0.0
    %214 = vmatprep.subr.mxu0 0.0
    %215 = vmatpush1.msra.mxu0 0.0
    %216 = vmatprep.subr.mxu0 0.0
    %217 = vmatpush1.msra.mxu0 0.0
    %218 = vmatprep.subr.mxu0 0.0
    %219 = vmatpush1.msra.mxu0 0.0
    %220 = vmatprep.subr.mxu0 0.0
    %221 = vmatpush1.msra.mxu0 %v184
    %222 = vmatprep.subr.mxu0 0.0
    %223 = vmatpush2.msra.mxu0 0.0
    %224 = vmatprep.subr.mxu0 0.0
    %225 = vmatpush2.msra.mxu0 0.0
    %226 = vmatprep.subr.mxu0 0.0
    %227 = vmatpush2.msra.mxu0 0.0
    %228 = vmatprep.subr.mxu0 0.0
    %229 = vmatpush2.msra.mxu0 0.0
    %230 = vmatprep.subr.mxu0 0.0
    %231 = vmatpush2.msra.mxu0 0.0
    %232 = vmatprep.subr.mxu0 0.0
    %233 = vmatpush2.msra.mxu0 0.0
    %234 = vmatprep.subr.mxu0 0.0
    %235 = vmatpush2.msra.mxu0 0.0
    %236 = vmatprep.subr.mxu0 0.0
    %237 = vmatpush2.msra.mxu0 0.0
    %238 = vmatprep.subr.mxu0 0.0
    %239 = vmatpush2.msra.mxu0 0.0
    %240 = vmatprep.subr.mxu0 0.0
    %241 = vmatpush2.msra.mxu0 0.0
    %242 = vmatprep.subr.mxu0 0.0
    %243 = vmatpush2.msra.mxu0 0.0
    %244 = vmatprep.subr.mxu0 0.0
    %245 = vmatpush2.msra.mxu0 0.0
    %246 = vmatprep.subr.mxu0 0.0
    %247 = vmatpush2.msra.mxu0 0.0
    %248 = vmatprep.subr.mxu0 0.0
    %249 = vmatpush2.msra.mxu0 0.0
    %250 = vmatprep.subr.mxu0 0.0
    %251 = vmatpush2.msra.mxu0 0.0
    %252 = vmatprep.subr.mxu0 0.0
    %253 = vmatpush2.msra.mxu0 0.0
    %254 = vmatprep.mubr.f32.mxu0 0.0
    %255 = vmatmul.mubr.f32.gmra.mxu0 %v188
    %v256 = vpop.f32.mrf.mxu0
    %v257 = vadd.f32 %v185, %v256
    %v258 = vpop.f32.mrf.mxu0
    %259 = vdwg.mxu0
    %v260 = vmax.f32 %v257, 0.0
    %v261 = vstv %s78
    %v262 = vmul.f32 %v261, %v182
    %v263 = vmul.f32 %v261, %v183
    %vm264 = vcmask 523264
    %v266 = vsel %vm264, %v260, 0
    %268 = vmatprep.subr.mxu0 0.0
    %269 = vmatpush1.msra.mxu0 0.0
    %270 = vmatprep.subr.mxu0 0.0
    %271 = vmatpush1.msra.mxu0 0.0
    %272 = vmatprep.subr.mxu0 0.0
    %273 = vmatpush1.msra.mxu0 0.0
    %274 = vmatprep.subr.mxu0 0.0
    %275 = vmatpush1.msra.mxu0 0.0
    %276 = vmatprep.subr.mxu0 0.0
    %277 = vmatpush1.msra.mxu0 0.0
    %278 = vmatprep.subr.mxu0 0.0
    %279 = vmatpush1.msra.mxu0 0.0
    %280 = vmatprep.subr.mxu0 0.0
    %281 = vmatpush1.msra.mxu0 0.0
    %282 = vmatprep.subr.mxu0 0.0
    %283 = vmatpush1.msra.mxu0 0.0
    %284 = vmatprep.subr.mxu0 %v97
    %285 = vmatpush1.msra.mxu0 %v96
    %286 = vmatprep.subr.mxu0 %v95
    %287 = vmatpush1.msra.mxu0 %v94
    %288 = vmatprep.subr.mxu0 %v93
    %289 = vmatpush1.msra.mxu0 %v92
    %290 = vmatprep.subr.mxu0 %v91
    %291 = vmatpush1.msra.mxu0 %v90
    %292 = vmatprep.subr.mxu0 %v89
    %293 = vmatpush1.msra.mxu0 %v88
    %294 = vmatprep.subr.mxu0 %v87
    %295 = vmatpush1.msra.mxu0 %v86
    %296 = vmatprep.subr.mxu0 %v85
    %297 = vmatpush1.msra.mxu0 %v84
    %298 = vmatprep.subr.mxu0 %v83
    %299 = vmatpush1.msra.mxu0 %v82
    %300 = vmatprep.subr.mxu0 0.0
    %301 = vmatpush2.msra.mxu0 0.0
    %302 = vmatprep.subr.mxu0 0.0
    %303 = vmatpush2.msra.mxu0 0.0
    %304 = vmatprep.subr.mxu0 0.0
    %305 = vmatpush2.msra.mxu0 0.0
    %306 = vmatprep.subr.mxu0 0.0
    %307 = vmatpush2.msra.mxu0 0.0
    %308 = vmatprep.subr.mxu0 0.0
    %309 = vmatpush2.msra.mxu0 0.0
    %310 = vmatprep.subr.mxu0 0.0
    %311 = vmatpush2.msra.mxu0 0.0
    %312 = vmatprep.subr.mxu0 0.0
    %313 = vmatpush2.msra.mxu0 0.0
    %314 = vmatprep.subr.mxu0 0.0
    %315 = vmatpush2.msra.mxu0 0.0
    %316 = vmatprep.subr.mxu0 0.0
    %317 = vmatpush2.msra.mxu0 0.0
    %318 = vmatprep.subr.mxu0 0.0
    %319 = vmatpush2.msra.mxu0 0.0
    %320 = vmatprep.subr.mxu0 0.0
    %321 = vmatpush2.msra.mxu0 0.0
    %322 = vmatprep.subr.mxu0 0.0
    %323 = vmatpush2.msra.mxu0 0.0
    %324 = vmatprep.subr.mxu0 0.0
    %325 = vmatpush2.msra.mxu0 0.0
    %326 = vmatprep.subr.mxu0 0.0
    %327 = vmatpush2.msra.mxu0 0.0
    %328 = vmatprep.subr.mxu0 0.0
    %329 = vmatpush2.msra.mxu0 0.0
    %330 = vmatprep.subr.mxu0 0.0
    %331 = vmatpush2.msra.mxu0 0.0
    %332 = vmatprep.mubr.f32.mxu0 0.0
    %333 = vmatmul.mubr.f32.gmra.mxu0 %v266
    %v334 = vpop.f32.mrf.mxu0
    %v335 = vadd.f32 %v262, %v334
    %v336 = vpop.f32.mrf.mxu0
    %v337 = vadd.f32 %v263, %v336
    %338 = vdwg.mxu0
    %v339 = vstv %s79
    %v340 = vadd.f32 %v335, %v339
    %v341 = vadd.f32 %v337, %v339
    %v342 = vxor.u32 %v340, 2147483648
    %v343 = vxor.u32 %v341, 2147483648
    %v344 = vmul.f32 %v342, 1.442695
    %v345 = vpow.pop %v344
    %v346 = vmul.f32 %v343, 1.442695
    %v347 = vpow.pop %v346
    %v348 = vadd.f32 %v345, 1.0
    %v349 = vadd.f32 %v347, 1.0
    %v350 = vrcp.pop %v348
    %v351 = vmul.f32 1.0, %v350
    %v352 = vrcp.pop %v349
    %v353 = vmul.f32 1.0, %v352
    %v356 = vcombine.low %v351, %v353
    %v358 = vunpack.c.l.s4 1966171168
    %v359 = vunpack.c.0.s8 %v358
    %v360 = vlaneseq
    %v361 = vshrl.u32 %v360, 7
    %v362 = vsub.s32 %v359, %v361
    %v363 = vrot.slane %v356, %v362
    %v365 = vunpack.c.l.s4 1966171168
    %v366 = vunpack.c.0.s8 %v365
    %v367 = vlaneseq
    %v368 = vshrl.u32 %v367, 7
    %v369 = vsub.s32 %v366, %v368
    %v370 = vrot.slane %v363, %v369
    %v372 = vlaneseq
    %vm373 = vcmp.ge.s32.totalorder %v372, 0
    %vm374 = vcmp.lt.s32.totalorder %v372, 256
    %vm375 = vmand %vm373, %vm374
    %376 = vst.msk [vmem:[#allocation10] sm:$0x3] %vm375, %v370
    %s377 = scalar_lea.vmem [#allocation7], 8
    %v378 = vld [vmem:[%s377] sm:$0xff]
    %v380 = vcombine.high %v378, %v378
    %v381 = vsel %vm106, %v378, 0
    %v383 = vsel %vm106, %v380, 0
    %385 = vmatprep.subr.mxu0 0.0
    %386 = vmatpush1.msra.mxu0 0.0
    %387 = vmatprep.subr.mxu0 0.0
    %388 = vmatpush1.msra.mxu0 0.0
    %389 = vmatprep.subr.mxu0 0.0
    %390 = vmatpush1.msra.mxu0 0.0
    %391 = vmatprep.subr.mxu0 0.0
    %392 = vmatpush1.msra.mxu0 0.0
    %393 = vmatprep.subr.mxu0 0.0
    %394 = vmatpush1.msra.mxu0 0.0
    %395 = vmatprep.subr.mxu0 0.0
    %396 = vmatpush1.msra.mxu0 0.0
    %397 = vmatprep.subr.mxu0 0.0
    %398 = vmatpush1.msra.mxu0 0.0
    %399 = vmatprep.subr.mxu0 0.0
    %400 = vmatpush1.msra.mxu0 0.0
    %401 = vmatprep.subr.mxu0 0.0
    %402 = vmatpush1.msra.mxu0 0.0
    %403 = vmatprep.subr.mxu0 0.0
    %404 = vmatpush1.msra.mxu0 0.0
    %405 = vmatprep.subr.mxu0 0.0
    %406 = vmatpush1.msra.mxu0 0.0
    %407 = vmatprep.subr.mxu0 0.0
    %408 = vmatpush1.msra.mxu0 0.0
    %409 = vmatprep.subr.mxu0 0.0
    %410 = vmatpush1.msra.mxu0 0.0
    %411 = vmatprep.subr.mxu0 0.0
    %412 = vmatpush1.msra.mxu0 0.0
    %413 = vmatprep.subr.mxu0 0.0
    %414 = vmatpush1.msra.mxu0 0.0
    %415 = vmatprep.subr.mxu0 %v383
    %416 = vmatpush1.msra.mxu0 %v381
    %417 = vmatprep.subr.mxu0 0.0
    %418 = vmatpush2.msra.mxu0 0.0
    %419 = vmatprep.subr.mxu0 0.0
    %420 = vmatpush2.msra.mxu0 0.0
    %421 = vmatprep.subr.mxu0 0.0
    %422 = vmatpush2.msra.mxu0 0.0
    %423 = vmatprep.subr.mxu0 0.0
    %424 = vmatpush2.msra.mxu0 0.0
    %425 = vmatprep.subr.mxu0 0.0
    %426 = vmatpush2.msra.mxu0 0.0
    %427 = vmatprep.subr.mxu0 0.0
    %428 = vmatpush2.msra.mxu0 0.0
    %429 = vmatprep.subr.mxu0 0.0
    %430 = vmatpush2.msra.mxu0 0.0
    %431 = vmatprep.subr.mxu0 0.0
    %432 = vmatpush2.msra.mxu0 0.0
    %433 = vmatprep.subr.mxu0 0.0
    %434 = vmatpush2.msra.mxu0 0.0
    %435 = vmatprep.subr.mxu0 0.0
    %436 = vmatpush2.msra.mxu0 0.0
    %437 = vmatprep.subr.mxu0 0.0
    %438 = vmatpush2.msra.mxu0 0.0
    %439 = vmatprep.subr.mxu0 0.0
    %440 = vmatpush2.msra.mxu0 0.0
    %441 = vmatprep.subr.mxu0 0.0
    %442 = vmatpush2.msra.mxu0 0.0
    %443 = vmatprep.subr.mxu0 0.0
    %444 = vmatpush2.msra.mxu0 0.0
    %445 = vmatprep.subr.mxu0 0.0
    %446 = vmatpush2.msra.mxu0 0.0
    %447 = vmatprep.subr.mxu0 0.0
    %448 = vmatpush2.msra.mxu0 0.0
    %449 = vmatprep.mubr.f32.mxu0 0.0
    %450 = vmatmul.mubr.f32.gmra.mxu0 %v104
    %v451 = vpop.f32.mrf.mxu0
    %v452 = vadd.f32 %v99, %v451
    %v453 = vpop.f32.mrf.mxu0
    %v454 = vadd.f32 %v99, %v453
    %455 = vdwg.mxu0
    %v456 = vmax.f32 %v452, 0.0
    %v457 = vmax.f32 %v454, 0.0
    %s458 = scalar_lea.vmem [#allocation9], 8
    %v459 = vld [vmem:[%s458] sm:$0xff]
    %460 = vmatprep.subr.mxu0 0.0
    %461 = vmatpush1.msra.mxu0 0.0
    %462 = vmatprep.subr.mxu0 0.0
    %463 = vmatpush1.msra.mxu0 0.0
    %464 = vmatprep.subr.mxu0 0.0
    %465 = vmatpush1.msra.mxu0 0.0
    %466 = vmatprep.subr.mxu0 0.0
    %467 = vmatpush1.msra.mxu0 0.0
    %468 = vmatprep.subr.mxu0 0.0
    %469 = vmatpush1.msra.mxu0 0.0
    %470 = vmatprep.subr.mxu0 0.0
    %471 = vmatpush1.msra.mxu0 0.0
    %472 = vmatprep.subr.mxu0 0.0
    %473 = vmatpush1.msra.mxu0 0.0
    %474 = vmatprep.subr.mxu0 0.0
    %475 = vmatpush1.msra.mxu0 0.0
    %476 = vmatprep.subr.mxu0 0.0
    %477 = vmatpush1.msra.mxu0 0.0
    %478 = vmatprep.subr.mxu0 0.0
    %479 = vmatpush1.msra.mxu0 0.0
    %480 = vmatprep.subr.mxu0 0.0
    %481 = vmatpush1.msra.mxu0 0.0
    %482 = vmatprep.subr.mxu0 0.0
    %483 = vmatpush1.msra.mxu0 0.0
    %484 = vmatprep.subr.mxu0 0.0
    %485 = vmatpush1.msra.mxu0 0.0
    %486 = vmatprep.subr.mxu0 0.0
    %487 = vmatpush1.msra.mxu0 0.0
    %488 = vmatprep.subr.mxu0 0.0
    %489 = vmatpush1.msra.mxu0 0.0
    %490 = vmatprep.subr.mxu0 0.0
    %491 = vmatpush1.msra.mxu0 %v459
    %492 = vmatprep.subr.mxu0 0.0
    %493 = vmatpush2.msra.mxu0 0.0
    %494 = vmatprep.subr.mxu0 0.0
    %495 = vmatpush2.msra.mxu0 0.0
    %496 = vmatprep.subr.mxu0 0.0
    %497 = vmatpush2.msra.mxu0 0.0
    %498 = vmatprep.subr.mxu0 0.0
    %499 = vmatpush2.msra.mxu0 0.0
    %500 = vmatprep.subr.mxu0 0.0
    %501 = vmatpush2.msra.mxu0 0.0
    %502 = vmatprep.subr.mxu0 0.0
    %503 = vmatpush2.msra.mxu0 0.0
    %504 = vmatprep.subr.mxu0 0.0
    %505 = vmatpush2.msra.mxu0 0.0
    %506 = vmatprep.subr.mxu0 0.0
    %507 = vmatpush2.msra.mxu0 0.0
    %508 = vmatprep.subr.mxu0 0.0
    %509 = vmatpush2.msra.mxu0 0.0
    %510 = vmatprep.subr.mxu0 0.0
    %511 = vmatpush2.msra.mxu0 0.0
    %512 = vmatprep.subr.mxu0 0.0
    %513 = vmatpush2.msra.mxu0 0.0
    %514 = vmatprep.subr.mxu0 0.0
    %515 = vmatpush2.msra.mxu0 0.0
    %516 = vmatprep.subr.mxu0 0.0
    %517 = vmatpush2.msra.mxu0 0.0
    %518 = vmatprep.subr.mxu0 0.0
    %519 = vmatpush2.msra.mxu0 0.0
    %520 = vmatprep.subr.mxu0 0.0
    %521 = vmatpush2.msra.mxu0 0.0
    %522 = vmatprep.subr.mxu0 0.0
    %523 = vmatpush2.msra.mxu0 0.0
    %524 = vmatprep.mubr.f32.mxu0 0.0
    %525 = vmatmul.mubr.f32.gmra.mxu0 %v188
    %v526 = vpop.f32.mrf.mxu0
    %v527 = vadd.f32 %v185, %v526
    %v528 = vpop.f32.mrf.mxu0
    %529 = vdwg.mxu0
    %v530 = vmax.f32 %v527, 0.0
    %v531 = vmul.f32 %v261, %v456
    %v532 = vmul.f32 %v261, %v457
    %v534 = vsel %vm264, %v530, 0
    %536 = vmatprep.subr.mxu0 0.0
    %537 = vmatpush1.msra.mxu0 0.0
    %538 = vmatprep.subr.mxu0 0.0
    %539 = vmatpush1.msra.mxu0 0.0
    %540 = vmatprep.subr.mxu0 0.0
    %541 = vmatpush1.msra.mxu0 0.0
    %542 = vmatprep.subr.mxu0 0.0
    %543 = vmatpush1.msra.mxu0 0.0
    %544 = vmatprep.subr.mxu0 0.0
    %545 = vmatpush1.msra.mxu0 0.0
    %546 = vmatprep.subr.mxu0 0.0
    %547 = vmatpush1.msra.mxu0 0.0
    %548 = vmatprep.subr.mxu0 0.0
    %549 = vmatpush1.msra.mxu0 0.0
    %550 = vmatprep.subr.mxu0 0.0
    %551 = vmatpush1.msra.mxu0 0.0
    %552 = vmatprep.subr.mxu0 %v97
    %553 = vmatpush1.msra.mxu0 %v96
    %554 = vmatprep.subr.mxu0 %v95
    %555 = vmatpush1.msra.mxu0 %v94
    %556 = vmatprep.subr.mxu0 %v93
    %557 = vmatpush1.msra.mxu0 %v92
    %558 = vmatprep.subr.mxu0 %v91
    %559 = vmatpush1.msra.mxu0 %v90
    %560 = vmatprep.subr.mxu0 %v89
    %561 = vmatpush1.msra.mxu0 %v88
    %562 = vmatprep.subr.mxu0 %v87
    %563 = vmatpush1.msra.mxu0 %v86
    %564 = vmatprep.subr.mxu0 %v85
    %565 = vmatpush1.msra.mxu0 %v84
    %566 = vmatprep.subr.mxu0 %v83
    %567 = vmatpush1.msra.mxu0 %v82
    %568 = vmatprep.subr.mxu0 0.0
    %569 = vmatpush2.msra.mxu0 0.0
    %570 = vmatprep.subr.mxu0 0.0
    %571 = vmatpush2.msra.mxu0 0.0
    %572 = vmatprep.subr.mxu0 0.0
    %573 = vmatpush2.msra.mxu0 0.0
    %574 = vmatprep.subr.mxu0 0.0
    %575 = vmatpush2.msra.mxu0 0.0
    %576 = vmatprep.subr.mxu0 0.0
    %577 = vmatpush2.msra.mxu0 0.0
    %578 = vmatprep.subr.mxu0 0.0
    %579 = vmatpush2.msra.mxu0 0.0
    %580 = vmatprep.subr.mxu0 0.0
    %581 = vmatpush2.msra.mxu0 0.0
    %582 = vmatprep.subr.mxu0 0.0
    %583 = vmatpush2.msra.mxu0 0.0
    %584 = vmatprep.subr.mxu0 0.0
    %585 = vmatpush2.msra.mxu0 0.0
    %586 = vmatprep.subr.mxu0 0.0
    %587 = vmatpush2.msra.mxu0 0.0
    %588 = vmatprep.subr.mxu0 0.0
    %589 = vmatpush2.msra.mxu0 0.0
    %590 = vmatprep.subr.mxu0 0.0
    %591 = vmatpush2.msra.mxu0 0.0
    %592 = vmatprep.subr.mxu0 0.0
    %593 = vmatpush2.msra.mxu0 0.0
    %594 = vmatprep.subr.mxu0 0.0
    %595 = vmatpush2.msra.mxu0 0.0
    %596 = vmatprep.subr.mxu0 0.0
    %597 = vmatpush2.msra.mxu0 0.0
    %598 = vmatprep.subr.mxu0 0.0
    %599 = vmatpush2.msra.mxu0 0.0
    %600 = vmatprep.mubr.f32.mxu0 0.0
    %601 = vmatmul.mubr.f32.gmra.mxu0 %v534
    %v602 = vpop.f32.mrf.mxu0
    %v603 = vadd.f32 %v531, %v602
    %v604 = vpop.f32.mrf.mxu0
    %v605 = vadd.f32 %v532, %v604
    %606 = vdwg.mxu0
    %v607 = vadd.f32 %v603, %v339
    %v608 = vadd.f32 %v605, %v339
    %v609 = vxor.u32 %v607, 2147483648
    %v610 = vxor.u32 %v608, 2147483648
    %v611 = vmul.f32 %v609, 1.442695
    %v612 = vpow.pop %v611
    %v613 = vmul.f32 %v610, 1.442695
    %v614 = vpow.pop %v613
    %v615 = vadd.f32 %v612, 1.0
    %v616 = vadd.f32 %v614, 1.0
    %v617 = vrcp.pop %v615
    %v618 = vmul.f32 1.0, %v617
    %v619 = vrcp.pop %v616
    %v620 = vmul.f32 1.0, %v619
    %v623 = vcombine.low %v618, %v620
    %v625 = vunpack.c.l.s4 1966171168
    %v626 = vunpack.c.0.s8 %v625
    %v627 = vlaneseq
    %v628 = vshrl.u32 %v627, 7
    %v629 = vsub.s32 %v626, %v628
    %v630 = vrot.slane %v623, %v629
    %v632 = vunpack.c.l.s4 1966171168
    %v633 = vunpack.c.0.s8 %v632
    %v634 = vlaneseq
    %v635 = vshrl.u32 %v634, 7
    %v636 = vsub.s32 %v633, %v635
    %v637 = vrot.slane %v630, %v636
    %s639 = scalar_lea.vmem [#allocation10], 2
    %640 = vst.msk [vmem:[%s639] sm:$0x3] %vm375, %v637
    // Predicated region
    $region42: #{tpu_custom_call.1} parent=1 // pred_check
      _
    $region43: #{tpu_custom_call.1} parent=1 // pred_check_branch
      %642 = sbr.rel (0) target = $region45
    $region44: #{tpu_custom_call.1} parent=1 // pred_region
      %s644 = ssub.s32 64, 64
      %645 = vsyncadd [#allocation4], %s644
      %s646 = sshll.u32 [#allocation10], 4
      %s647 = int_to_ptr.vmem [resolvable:$true] %s646
      %652 = dma.vmem_to_hbm [thread:$0]  %s647, 64, %s6, [#allocation4], 32, 32, 2
    $region45: #{tpu_custom_call.1} parent=1 // pred_fallthru
      _
    // Predicated region
    $region46: #{tpu_custom_call.1} parent=1 // pred_check
      _
    $region47: #{tpu_custom_call.1} parent=1 // pred_check_branch
      %654 = sbr.rel (0) target = $region49
    $region48: #{tpu_custom_call.1} parent=1 // pred_region
      %655 = dma.done [#allocation4], 64
    $region49: #{tpu_custom_call.1} parent=1 // pred_fallthru
      _
    %656 = vsyncpa [#allocation3], 1
    %657 = vsyncpa [#allocation8], 1
    %658 = vsyncpa [#allocation4], 1
    %659 = vsyncpa [#allocation5], 1

</llo_original>
